<compile_context>
chip_gen: v7x
topology: tpu7x:2x2x1
jax: 0.10.0
libtpu: 0.0.40
codegen_flags: <defaults>
</compile_context>

<pallas_src>
import jax
import jax.numpy as jnp
from jax.experimental import pallas as pl
from jax.experimental.pallas import tpu as pltpu

IN_DIM = 25
IN_PAD = 32     # pad 25 -> 32 so f32 x rows are 128-byte aligned for the DMA
H_DIM = 64
OUT_DIM = 4     # stored un-padded: 4 == full last dim, so the BlockSpec is legal


def _round_up(n, m):
    return -(-n // m) * m


def agentnet_kernel(x_ref, w1_ref, b1_ref, w2_ref, b2_ref, w3_ref, b3_ref, o_ref):
    # Whole MLP hot path: 3 MXU matmuls (bf16 in, f32 accumulate) + VPU bias/ReLU in f32.
    x = x_ref[...].astype(jnp.bfloat16)                                # f32 HBM read, in-register cast
    h1 = jnp.dot(x, w1_ref[...], preferred_element_type=jnp.float32) + b1_ref[...]
    h1 = jnp.maximum(h1, 0.0)                                          # f32 on VPU
    h2 = jnp.dot(h1.astype(jnp.bfloat16), w2_ref[...],
                 preferred_element_type=jnp.float32) + b2_ref[...]
    h2 = jnp.maximum(h2, 0.0)                                          # f32 on VPU
    out = jnp.dot(h2.astype(jnp.bfloat16), w3_ref[...],
                  preferred_element_type=jnp.float32) + b3_ref[...]
    o_ref[...] = out                                                   # (T, 4) f32, un-padded store


def prepare_params(params):
    """One-time prep (outside the hot path): cast weights to bf16 and zero-pad
    W1 from 25 to 32 input rows (matches the zero-padded x columns)."""
    w1, b1, w2, b2, w3, b3 = params
    w1p = jnp.zeros((IN_PAD, H_DIM), jnp.float32).at[:IN_DIM, :].set(w1)
    return (w1p.astype(jnp.bfloat16), b1.astype(jnp.float32),
            w2.astype(jnp.bfloat16), b2.astype(jnp.float32),
            w3.astype(jnp.bfloat16), b3.astype(jnp.float32))


def _choose_batch_tile(B):
    """>=2 grid steps whenever B >= 32 (v7x has 2 TCs; extra steps are ~free on
    v5e/v6e), tiles capped at 2048 rows (VMEM-safe on v7x's 64 MiB)."""
    if B < 32:
        return _round_up(max(B, 8), 16)           # single step; too small to split
    return min(_round_up(pl.cdiv(B, 2), 16), 2048)


def agentnet_forward(x, kernel_params, *, batch_tile=None):
    """x: (B, 25) float. Returns (B, 4) float32."""
    w1, b1, w2, b2, w3, b3 = kernel_params
    B = x.shape[0]

    if batch_tile is None:
        batch_tile = _choose_batch_tile(B)
    batch_tile = _round_up(max(8, batch_tile), 16)
    Bp = _round_up(B, batch_tile)                 # pad ragged batches instead of asserting

    # Single pad op handles both ragged batch rows and the 25->32 column pad.
    x = x.astype(jnp.float32)
    if Bp != B or x.shape[1] != IN_PAD:
        x = jnp.pad(x, ((0, Bp - B), (0, IN_PAD - x.shape[1])))

    grid = (Bp // batch_tile,)
    full = lambda i: (0, 0)                       # weights: constant index -> fetched once, resident

    flops = 2 * Bp * (IN_PAD * H_DIM + H_DIM * H_DIM + H_DIM * OUT_DIM)
    weight_bytes = (IN_PAD * H_DIM * 2 + H_DIM * 4 +
                    H_DIM * H_DIM * 2 + H_DIM * 4 +
                    H_DIM * OUT_DIM * 2 + OUT_DIM * 4)
    bytes_accessed = Bp * (IN_PAD * 4 + OUT_DIM * 4) + weight_bytes

    out = pl.pallas_call(
        agentnet_kernel,
        out_shape=jax.ShapeDtypeStruct((Bp, OUT_DIM), jnp.float32),
        grid_spec=pltpu.PrefetchScalarGridSpec(
            num_scalar_prefetch=0,
            grid=grid,
            in_specs=[
                pl.BlockSpec((batch_tile, IN_PAD), lambda i: (i, 0)),  # x tile (f32, 128B rows)
                pl.BlockSpec((IN_PAD, H_DIM), full),                   # W1 padded (bf16)
                pl.BlockSpec((1, H_DIM), full),                        # b1 (f32)
                pl.BlockSpec((H_DIM, H_DIM), full),                    # W2 (bf16)
                pl.BlockSpec((1, H_DIM), full),                        # b2 (f32)
                pl.BlockSpec((H_DIM, OUT_DIM), full),                  # W3 (bf16)
                pl.BlockSpec((1, OUT_DIM), full),                      # b3 (f32)
            ],
            out_specs=pl.BlockSpec((batch_tile, OUT_DIM), lambda i: (i, 0)),
        ),
        compiler_params=pltpu.CompilerParams(
            dimension_semantics=("parallel",),
        ),
        cost_estimate=pl.CostEstimate(
            flops=flops, transcendentals=0, bytes_accessed=bytes_accessed),
    )(x, w1, b1, w2, b2, w3, b3)

    return out if Bp == B else out[:B]


def init_params(key):
    """Deterministic init mirroring nn.Linear shapes (stored as (in, out))."""
    ks = jax.random.split(key, 6)

    def linear_init(kw, kb, fan_in, fan_out):
        bound = 1.0 / jnp.sqrt(fan_in)
        w = jax.random.uniform(kw, (fan_in, fan_out), jnp.float32, -bound, bound)
        b = jax.random.uniform(kb, (1, fan_out), jnp.float32, -bound, bound)
        return w, b

    w1, b1 = linear_init(ks[0], ks[1], IN_DIM, H_DIM)
    w2, b2 = linear_init(ks[2], ks[3], H_DIM, H_DIM)
    w3, b3 = linear_init(ks[4], ks[5], H_DIM, OUT_DIM)
    return (w1, b1, w2, b2, w3, b3)


def reference_forward(x, params):
    """Pure f32 reference (PyTorch-equivalent math)."""
    w1, b1, w2, b2, w3, b3 = params
    h1 = jnp.maximum(x @ w1 + b1, 0.0)
    h2 = jnp.maximum(h1 @ w2 + b2, 0.0)
    return h2 @ w3 + b3


if __name__ == "__main__":
    key = jax.random.PRNGKey(0)
    k_params, k_x = jax.random.split(key)

    params = init_params(k_params)
    kparams = prepare_params(params)

    B = 64
    x = jax.random.normal(k_x, (B, IN_DIM), dtype=jnp.float32)

    # Default tiling: 2 grid steps of 32 rows (splits across v7x's 2 TCs).
    out = jax.block_until_ready(agentnet_forward(x, kparams))
    assert out.shape == (B, OUT_DIM)

    # Gate against the full-f32 reference (bf16 MXU inputs cost ~1e-3 relative).
    ref_f32 = reference_forward(x, params)
    assert jnp.allclose(out, ref_f32, atol=3e-2, rtol=3e-2), "mismatch vs f32 reference"

    # Exercise the ragged-batch / multi-step-grid path (padded to 64, 4 steps).
    B2 = 50
    x2 = jax.random.normal(jax.random.PRNGKey(1), (B2, IN_DIM), dtype=jnp.float32)
    out2 = jax.block_until_ready(agentnet_forward(x2, kparams, batch_tile=16))
    assert out2.shape == (B2, OUT_DIM)
    ref2 = reference_forward(x2, params)
    assert jnp.allclose(out2, ref2, atol=3e-2, rtol=3e-2), "mismatch (ragged batch / tiled grid)"

    print("KERNEL_OK")
</pallas_src>

<mosaic_0001>
module attributes {stable_mosaic.version = 11 : i64} {
  func.func @agentnet_kernel(%arg0: i32, %arg1: memref<32x32xf32, #tpu.memory_space<vmem>>, %arg2: memref<32x64xbf16, #tpu.memory_space<vmem>>, %arg3: memref<1x64xf32, #tpu.memory_space<vmem>>, %arg4: memref<64x64xbf16, #tpu.memory_space<vmem>>, %arg5: memref<1x64xf32, #tpu.memory_space<vmem>>, %arg6: memref<64x4xbf16, #tpu.memory_space<vmem>>, %arg7: memref<1x4xf32, #tpu.memory_space<vmem>>, %arg8: memref<32x4xf32, #tpu.memory_space<vmem>>) attributes {dimension_semantics = [#tpu.dimension_semantics<parallel>], iteration_bounds = array<i64: 2>, scalar_prefetch = 0 : i64, scratch_operands = 0 : i64, tpu.core_type = #tpu.core_type<tc>, window_params = [{transform_indices = @transform_0, window_bounds = array<i64: 32, 32>}, {pipeline_mode = #tpu.pipeline_mode<synchronous>, transform_indices = @transform_1, window_bounds = array<i64: 32, 64>}, {pipeline_mode = #tpu.pipeline_mode<synchronous>, transform_indices = @transform_2, window_bounds = array<i64: 1, 64>}, {pipeline_mode = #tpu.pipeline_mode<synchronous>, transform_indices = @transform_3, window_bounds = array<i64: 64, 64>}, {pipeline_mode = #tpu.pipeline_mode<synchronous>, transform_indices = @transform_4, window_bounds = array<i64: 1, 64>}, {pipeline_mode = #tpu.pipeline_mode<synchronous>, transform_indices = @transform_5, window_bounds = array<i64: 64, 4>}, {pipeline_mode = #tpu.pipeline_mode<synchronous>, transform_indices = @transform_6, window_bounds = array<i64: 1, 4>}, {transform_indices = @transform_7, window_bounds = array<i64: 32, 4>}]} {
    %c0 = arith.constant 0 : index
    %c0_0 = arith.constant 0 : index
    %0 = vector.load %arg1[%c0, %c0_0] : memref<32x32xf32, #tpu.memory_space<vmem>>, vector<32x32xf32>
    %1 = arith.truncf %0 : vector<32x32xf32> to vector<32x32xbf16>
    %c0_1 = arith.constant 0 : index
    %c0_2 = arith.constant 0 : index
    %2 = vector.load %arg2[%c0_1, %c0_2] : memref<32x64xbf16, #tpu.memory_space<vmem>>, vector<32x64xbf16>
    %cst = arith.constant dense<0.000000e+00> : vector<32x64xf32>
    %3 = tpu.matmul %1, %2, %cst {dimension_numbers = #tpu.dot_dimension_numbers<[1], [0], [0], [1], [0, 0, 1, 1], [], []>} : vector<32x32xbf16>, vector<32x64xbf16>, vector<32x64xf32> -> vector<32x64xf32>
    %c0_3 = arith.constant 0 : index
    %c0_4 = arith.constant 0 : index
    %4 = vector.load %arg3[%c0_3, %c0_4] : memref<1x64xf32, #tpu.memory_space<vmem>>, vector<1x64xf32>
    %5 = vector.broadcast %4 : vector<1x64xf32> to vector<32x64xf32>
    %6 = arith.addf %3, %5 : vector<32x64xf32>
    %cst_5 = arith.constant 0.000000e+00 : f32
    %7 = vector.broadcast %cst_5 : f32 to vector<32x64xf32>
    %8 = arith.maximumf %6, %7 : vector<32x64xf32>
    %9 = arith.truncf %8 : vector<32x64xf32> to vector<32x64xbf16>
    %c0_6 = arith.constant 0 : index
    %c0_7 = arith.constant 0 : index
    %10 = vector.load %arg4[%c0_6, %c0_7] : memref<64x64xbf16, #tpu.memory_space<vmem>>, vector<64x64xbf16>
    %cst_8 = arith.constant dense<0.000000e+00> : vector<32x64xf32>
    %11 = tpu.matmul %9, %10, %cst_8 {dimension_numbers = #tpu.dot_dimension_numbers<[1], [0], [0], [1], [0, 0, 1, 1], [], []>} : vector<32x64xbf16>, vector<64x64xbf16>, vector<32x64xf32> -> vector<32x64xf32>
    %c0_9 = arith.constant 0 : index
    %c0_10 = arith.constant 0 : index
    %12 = vector.load %arg5[%c0_9, %c0_10] : memref<1x64xf32, #tpu.memory_space<vmem>>, vector<1x64xf32>
    %13 = vector.broadcast %12 : vector<1x64xf32> to vector<32x64xf32>
    %14 = arith.addf %11, %13 : vector<32x64xf32>
    %cst_11 = arith.constant 0.000000e+00 : f32
    %15 = vector.broadcast %cst_11 : f32 to vector<32x64xf32>
    %16 = arith.maximumf %14, %15 : vector<32x64xf32>
    %17 = arith.truncf %16 : vector<32x64xf32> to vector<32x64xbf16>
    %c0_12 = arith.constant 0 : index
    %c0_13 = arith.constant 0 : index
    %18 = vector.load %arg6[%c0_12, %c0_13] : memref<64x4xbf16, #tpu.memory_space<vmem>>, vector<64x4xbf16>
    %cst_14 = arith.constant dense<0.000000e+00> : vector<32x4xf32>
    %19 = tpu.matmul %17, %18, %cst_14 {dimension_numbers = #tpu.dot_dimension_numbers<[1], [0], [0], [1], [0, 0, 1, 1], [], []>} : vector<32x64xbf16>, vector<64x4xbf16>, vector<32x4xf32> -> vector<32x4xf32>
    %c0_15 = arith.constant 0 : index
    %c0_16 = arith.constant 0 : index
    %20 = vector.load %arg7[%c0_15, %c0_16] : memref<1x4xf32, #tpu.memory_space<vmem>>, vector<1x4xf32>
    %21 = vector.broadcast %20 : vector<1x4xf32> to vector<32x4xf32>
    %22 = arith.addf %19, %21 : vector<32x4xf32>
    %c0_17 = arith.constant 0 : index
    %c0_18 = arith.constant 0 : index
    %23 = vector.load %arg8[%c0_17, %c0_18] : memref<32x4xf32, #tpu.memory_space<vmem>>, vector<32x4xf32>
    tpu.vector_store %arg8[%c0_17, %c0_18], %22 {strides = array<i32>} : memref<32x4xf32, #tpu.memory_space<vmem>>, vector<32x4xf32>,
    return
  }
  func.func @transform_0(%arg0: i32) -> (i32, i32) {
    %c0_i32 = arith.constant 0 : i32
    %c0_i32_0 = arith.constant 0 : i32
    return %arg0, %c0_i32 : i32, i32
  }
  func.func @transform_1(%arg0: i32) -> (i32, i32) {
    %c0_i32 = arith.constant 0 : i32
    %c0_i32_0 = arith.constant 0 : i32
    %c0_i32_1 = arith.constant 0 : i32
    return %c0_i32, %c0_i32_0 : i32, i32
  }
  func.func @transform_2(%arg0: i32) -> (i32, i32) {
    %c0_i32 = arith.constant 0 : i32
    %c0_i32_0 = arith.constant 0 : i32
    %c0_i32_1 = arith.constant 0 : i32
    return %c0_i32, %c0_i32_0 : i32, i32
  }
  func.func @transform_3(%arg0: i32) -> (i32, i32) {
    %c0_i32 = arith.constant 0 : i32
    %c0_i32_0 = arith.constant 0 : i32
    %c0_i32_1 = arith.constant 0 : i32
    return %c0_i32, %c0_i32_0 : i32, i32
  }
  func.func @transform_4(%arg0: i32) -> (i32, i32) {
    %c0_i32 = arith.constant 0 : i32
    %c0_i32_0 = arith.constant 0 : i32
    %c0_i32_1 = arith.constant 0 : i32
    return %c0_i32, %c0_i32_0 : i32, i32
  }
  func.func @transform_5(%arg0: i32) -> (i32, i32) {
    %c0_i32 = arith.constant 0 : i32
    %c0_i32_0 = arith.constant 0 : i32
    %c0_i32_1 = arith.constant 0 : i32
    return %c0_i32, %c0_i32_0 : i32, i32
  }
  func.func @transform_6(%arg0: i32) -> (i32, i32) {
    %c0_i32 = arith.constant 0 : i32
    %c0_i32_0 = arith.constant 0 : i32
    %c0_i32_1 = arith.constant 0 : i32
    return %c0_i32, %c0_i32_0 : i32, i32
  }
  func.func @transform_7(%arg0: i32) -> (i32, i32) {
    %c0_i32 = arith.constant 0 : i32
    %c0_i32_0 = arith.constant 0 : i32
    return %arg0, %c0_i32 : i32, i32
  }
}

</mosaic_0001>

<llo_original>
// kernel: tpu_custom_call.1
$region0: #{tpu_custom_call.1}
  #allocation0 [shape = 'u32[]', space=smem, size = 0x4, offset = 0x4, fixed_abs, tag = 'smem constant byte address 0x4 - core index']
  #allocation1 [shape = 'u32[144,128]{1,0:T(1,128)}', space=vmem, size = 0x12000, scoped, tag = 'internal scratch']
  %s0 = inlined_call_operand.vmem [shape: f32[64,32], index: 0, kind: input, shape index: {}]
  %s1 = inlined_call_operand.vmem [shape: bf16[32,64], index: 1, kind: input, shape index: {}]
  %s2 = inlined_call_operand.vmem [shape: f32[1,64], index: 2, kind: input, shape index: {}]
  %s3 = inlined_call_operand.vmem [shape: bf16[64,64], index: 3, kind: input, shape index: {}]
  %s4 = inlined_call_operand.vmem [shape: f32[1,64], index: 4, kind: input, shape index: {}]
  %s5 = inlined_call_operand.vmem [shape: bf16[64,4], index: 5, kind: input, shape index: {}]
  %s6 = inlined_call_operand.vmem [shape: f32[1,4], index: 6, kind: input, shape index: {}]
  %s7 = inlined_call_operand.vmem [shape: f32[64,4], index: 7, kind: output, shape index: {}]
  %s8 = sld [smem:[#allocation0]]
  $region61: #{tpu_custom_call.1} parent=0
    _
  %s10 = ssub.s32 1, %s8
  %s11 = scalar_select 0, %s10, %s8
  loop: start=0, step=1, limit=4
  $region2: #{tpu_custom_call.1} parent=0 // loop_pre_header
    _
  $region3: #{tpu_custom_call.1} parent=0 // loop_header
    %s13 = sphi 0, %s17
    %p14 = scmp.ge.s32.totalorder %s13, 4
    %s23 = sphi 0, %s25
    %s26 = sphi 0, %s23
    %s27 = sphi 0, %s26
    %s43 = sphi 0, %s27
    %s47 = sphi 0, %s47
    %s49 = sphi 0, %s47
    %s50 = sphi 0, %s49
    %s64 = sphi 0, %s50
    %s68 = sphi 0, %s68
    %s70 = sphi 0, %s68
    %s71 = sphi 0, %s70
    %s85 = sphi 0, %s71
    %s89 = sphi 0, %s89
    %s91 = sphi 0, %s89
    %s92 = sphi 0, %s91
    %s106 = sphi 0, %s92
    %s110 = sphi 0, %s110
    %s112 = sphi 0, %s110
    %s113 = sphi 0, %s112
    %s127 = sphi 0, %s113
    %s131 = sphi 0, %s131
    %s133 = sphi 0, %s131
    %s134 = sphi 0, %s133
    %s148 = sphi 0, %s134
    %s152 = sphi 0, %s152
    %s154 = sphi 0, %s152
    %s155 = sphi 0, %s154
    %s169 = sphi 0, %s155
    %s175 = sphi 0, %s177
    %s178 = sphi 0, %s175
    %s179 = sphi 0, %s178
    %s195 = sphi 0, %s179
  $region4: #{tpu_custom_call.1} parent=0 // loop_header_branch
    %16 = sbr.rel (%p14) target = $region8
  $region5: #{tpu_custom_call.1} parent=0 // loop_body
    %s18 = ssub.s32 %s13, 1
    %s19 = ssub.s32 %s13, 2
    %s20 = sadd.s32 %s13, 1
    %s21 = ssub.s32 %s13, %s20
    %p22 = scmp.eq.s32.totalorder %s21, 0
    %s24 = sadd.s32 %s23, 1
    %s25 = scalar_select %p22, %s23, %s24
    %p28 = pneg %p22
    %p29 = scmp.eq.s32.totalorder %s13, 1
    %p30 = por %p28, %p29
    %p31 = scmp.ne.s32.totalorder %s23, %s26
    %p32 = scmp.eq.s32.totalorder %s13, 0
    %p33 = por %p31, %p32
    %p34 = scmp.ne.s32.totalorder %s23, %s26
    %p35 = scmp.eq.s32.totalorder %s18, 1
    %p36 = por %p34, %p35
    %p37 = scmp.ne.s32.totalorder %s26, %s27
    %p38 = scmp.eq.s32.totalorder %s18, 0
    %p39 = por %p37, %p38
    %p40 = scmp.ne.s32.totalorder %s26, %s27
    %p41 = scmp.eq.s32.totalorder %s19, 1
    %p42 = por %p40, %p41
    %p44 = scmp.ne.s32.totalorder %s27, %s43
    %p45 = scmp.eq.s32.totalorder %s19, 0
    %p46 = por %p44, %p45
    %s48 = sadd.s32 %s47, 1
    %p51 = scmp.eq.s32.totalorder %s13, 1
    %p52 = scmp.ne.s32.totalorder %s47, %s49
    %p53 = scmp.eq.s32.totalorder %s13, 0
    %p54 = por %p52, %p53
    %p55 = scmp.ne.s32.totalorder %s47, %s49
    %p56 = scmp.eq.s32.totalorder %s18, 1
    %p57 = por %p55, %p56
    %p58 = scmp.ne.s32.totalorder %s49, %s50
    %p59 = scmp.eq.s32.totalorder %s18, 0
    %p60 = por %p58, %p59
    %p61 = scmp.ne.s32.totalorder %s49, %s50
    %p62 = scmp.eq.s32.totalorder %s19, 1
    %p63 = por %p61, %p62
    %p65 = scmp.ne.s32.totalorder %s50, %s64
    %p66 = scmp.eq.s32.totalorder %s19, 0
    %p67 = por %p65, %p66
    %s69 = sadd.s32 %s68, 1
    %p72 = scmp.eq.s32.totalorder %s13, 1
    %p73 = scmp.ne.s32.totalorder %s68, %s70
    %p74 = scmp.eq.s32.totalorder %s13, 0
    %p75 = por %p73, %p74
    %p76 = scmp.ne.s32.totalorder %s68, %s70
    %p77 = scmp.eq.s32.totalorder %s18, 1
    %p78 = por %p76, %p77
    %p79 = scmp.ne.s32.totalorder %s70, %s71
    %p80 = scmp.eq.s32.totalorder %s18, 0
    %p81 = por %p79, %p80
    %p82 = scmp.ne.s32.totalorder %s70, %s71
    %p83 = scmp.eq.s32.totalorder %s19, 1
    %p84 = por %p82, %p83
    %p86 = scmp.ne.s32.totalorder %s71, %s85
    %p87 = scmp.eq.s32.totalorder %s19, 0
    %p88 = por %p86, %p87
    %s90 = sadd.s32 %s89, 1
    %p93 = scmp.eq.s32.totalorder %s13, 1
    %p94 = scmp.ne.s32.totalorder %s89, %s91
    %p95 = scmp.eq.s32.totalorder %s13, 0
    %p96 = por %p94, %p95
    %p97 = scmp.ne.s32.totalorder %s89, %s91
    %p98 = scmp.eq.s32.totalorder %s18, 1
    %p99 = por %p97, %p98
    %p100 = scmp.ne.s32.totalorder %s91, %s92
    %p101 = scmp.eq.s32.totalorder %s18, 0
    %p102 = por %p100, %p101
    %p103 = scmp.ne.s32.totalorder %s91, %s92
    %p104 = scmp.eq.s32.totalorder %s19, 1
    %p105 = por %p103, %p104
    %p107 = scmp.ne.s32.totalorder %s92, %s106
    %p108 = scmp.eq.s32.totalorder %s19, 0
    %p109 = por %p107, %p108
    %s111 = sadd.s32 %s110, 1
    %p114 = scmp.eq.s32.totalorder %s13, 1
    %p115 = scmp.ne.s32.totalorder %s110, %s112
    %p116 = scmp.eq.s32.totalorder %s13, 0
    %p117 = por %p115, %p116
    %p118 = scmp.ne.s32.totalorder %s110, %s112
    %p119 = scmp.eq.s32.totalorder %s18, 1
    %p120 = por %p118, %p119
    %p121 = scmp.ne.s32.totalorder %s112, %s113
    %p122 = scmp.eq.s32.totalorder %s18, 0
    %p123 = por %p121, %p122
    %p124 = scmp.ne.s32.totalorder %s112, %s113
    %p125 = scmp.eq.s32.totalorder %s19, 1
    %p126 = por %p124, %p125
    %p128 = scmp.ne.s32.totalorder %s113, %s127
    %p129 = scmp.eq.s32.totalorder %s19, 0
    %p130 = por %p128, %p129
    %s132 = sadd.s32 %s131, 1
    %p135 = scmp.eq.s32.totalorder %s13, 1
    %p136 = scmp.ne.s32.totalorder %s131, %s133
    %p137 = scmp.eq.s32.totalorder %s13, 0
    %p138 = por %p136, %p137
    %p139 = scmp.ne.s32.totalorder %s131, %s133
    %p140 = scmp.eq.s32.totalorder %s18, 1
    %p141 = por %p139, %p140
    %p142 = scmp.ne.s32.totalorder %s133, %s134
    %p143 = scmp.eq.s32.totalorder %s18, 0
    %p144 = por %p142, %p143
    %p145 = scmp.ne.s32.totalorder %s133, %s134
    %p146 = scmp.eq.s32.totalorder %s19, 1
    %p147 = por %p145, %p146
    %p149 = scmp.ne.s32.totalorder %s134, %s148
    %p150 = scmp.eq.s32.totalorder %s19, 0
    %p151 = por %p149, %p150
    %s153 = sadd.s32 %s152, 1
    %p156 = scmp.eq.s32.totalorder %s13, 1
    %p157 = scmp.ne.s32.totalorder %s152, %s154
    %p158 = scmp.eq.s32.totalorder %s13, 0
    %p159 = por %p157, %p158
    %p160 = scmp.ne.s32.totalorder %s152, %s154
    %p161 = scmp.eq.s32.totalorder %s18, 1
    %p162 = por %p160, %p161
    %p163 = scmp.ne.s32.totalorder %s154, %s155
    %p164 = scmp.eq.s32.totalorder %s18, 0
    %p165 = por %p163, %p164
    %p166 = scmp.ne.s32.totalorder %s154, %s155
    %p167 = scmp.eq.s32.totalorder %s19, 1
    %p168 = por %p166, %p167
    %p170 = scmp.ne.s32.totalorder %s155, %s169
    %p171 = scmp.eq.s32.totalorder %s19, 0
    %p172 = por %p170, %p171
    %s173 = ssub.s32 %s13, %s20
    %p174 = scmp.eq.s32.totalorder %s173, 0
    %s176 = sadd.s32 %s175, 1
    %s177 = scalar_select %p174, %s175, %s176
    %p180 = pneg %p174
    %p181 = scmp.eq.s32.totalorder %s13, 1
    %p182 = por %p180, %p181
    %p183 = scmp.ne.s32.totalorder %s175, %s178
    %p184 = scmp.eq.s32.totalorder %s13, 0
    %p185 = por %p183, %p184
    %p186 = scmp.ne.s32.totalorder %s175, %s178
    %p187 = scmp.eq.s32.totalorder %s18, 1
    %p188 = por %p186, %p187
    %p189 = scmp.ne.s32.totalorder %s178, %s179
    %p190 = scmp.eq.s32.totalorder %s18, 0
    %p191 = por %p189, %p190
    %p192 = scmp.ne.s32.totalorder %s178, %s179
    %p193 = scmp.eq.s32.totalorder %s19, 1
    %p194 = por %p192, %p193
    %p196 = scmp.ne.s32.totalorder %s179, %s195
    %p197 = scmp.eq.s32.totalorder %s19, 0
    %p198 = por %p196, %p197
    %p199 = scmp.le.s32.totalorder 1, %s13
    %p200 = scmp.lt.s32.totalorder %s13, 3
    %p201 = pnand %p199, %p200
    %p202 = pneg %p201
    // Predicated region
    $region9: #{tpu_custom_call.1} parent=5 // pred_check
      _
    $region10: #{tpu_custom_call.1} parent=5 // pred_check_branch
      %204 = sbr.rel (%p201) target = $region12
    $region11: #{tpu_custom_call.1} parent=5 // pred_region
      %s205 = ssub.s32 %s13, 1
      // Predicated region
      $region13: #{tpu_custom_call.1} parent=11 // pred_check
        %p206 = pneg %p60
      $region14: #{tpu_custom_call.1} parent=11 // pred_check_branch
        %208 = sbr.rel (%p206) target = $region16
      $region15: #{tpu_custom_call.1} parent=11 // pred_region
        _
      $region16: #{tpu_custom_call.1} parent=11 // pred_fallthru
        _
      // Predicated region
      $region17: #{tpu_custom_call.1} parent=11 // pred_check
        %p209 = pneg %p81
      $region18: #{tpu_custom_call.1} parent=11 // pred_check_branch
        %211 = sbr.rel (%p209) target = $region20
      $region19: #{tpu_custom_call.1} parent=11 // pred_region
        _
      $region20: #{tpu_custom_call.1} parent=11 // pred_fallthru
        _
      // Predicated region
      $region21: #{tpu_custom_call.1} parent=11 // pred_check
        %p212 = pneg %p102
      $region22: #{tpu_custom_call.1} parent=11 // pred_check_branch
        %214 = sbr.rel (%p212) target = $region24
      $region23: #{tpu_custom_call.1} parent=11 // pred_region
        _
      $region24: #{tpu_custom_call.1} parent=11 // pred_fallthru
        _
      // Predicated region
      $region25: #{tpu_custom_call.1} parent=11 // pred_check
        %p215 = pneg %p123
      $region26: #{tpu_custom_call.1} parent=11 // pred_check_branch
        %217 = sbr.rel (%p215) target = $region28
      $region27: #{tpu_custom_call.1} parent=11 // pred_region
        _
      $region28: #{tpu_custom_call.1} parent=11 // pred_fallthru
        _
      // Predicated region
      $region29: #{tpu_custom_call.1} parent=11 // pred_check
        %p218 = pneg %p144
      $region30: #{tpu_custom_call.1} parent=11 // pred_check_branch
        %220 = sbr.rel (%p218) target = $region32
      $region31: #{tpu_custom_call.1} parent=11 // pred_region
        _
      $region32: #{tpu_custom_call.1} parent=11 // pred_fallthru
        _
      // Predicated region
      $region33: #{tpu_custom_call.1} parent=11 // pred_check
        %p221 = pneg %p165
      $region34: #{tpu_custom_call.1} parent=11 // pred_check_branch
        %223 = sbr.rel (%p221) target = $region36
      $region35: #{tpu_custom_call.1} parent=11 // pred_region
        _
      $region36: #{tpu_custom_call.1} parent=11 // pred_fallthru
        _
    $region12: #{tpu_custom_call.1} parent=5 // pred_fallthru
      _
    %p224 = scmp.lt.s32.totalorder %s13, 2
    // Predicated region
    $region37: #{tpu_custom_call.1} parent=5 // pred_check
      %p225 = pneg %p224
    $region38: #{tpu_custom_call.1} parent=5 // pred_check_branch
      %227 = sbr.rel (%p225) target = $region40
    $region39: #{tpu_custom_call.1} parent=5 // pred_region
      // Predicated region
      $region41: #{tpu_custom_call.1} parent=39 // pred_check
        %p228 = pneg %p33
      $region42: #{tpu_custom_call.1} parent=39 // pred_check_branch
        %230 = sbr.rel (%p228) target = $region44
      $region43: #{tpu_custom_call.1} parent=39 // pred_region
        %s231 = smul.u32 4, %s13
        %p232 = scmp.lt.s32.totalorder %s231, 7
        %s233 = scalar_select %p232, %s231, 7
        %s234 = smul.addr %s233, 8
        %s235 = scalar_lea.vmem %s0, %s234
        %s236 = smul.u32 4, %s13
      $region44: #{tpu_custom_call.1} parent=39 // pred_fallthru
        _
    $region40: #{tpu_custom_call.1} parent=5 // pred_fallthru
      _
    %p237 = scmp.le.s32.totalorder 1, %s13
    %p238 = scmp.lt.s32.totalorder %s13, 3
    %p239 = pnand %p237, %p238
    %p240 = pneg %p239
    // Predicated region
    $region45: #{tpu_custom_call.1} parent=5 // pred_check
      _
    $region46: #{tpu_custom_call.1} parent=5 // pred_check_branch
      %242 = sbr.rel (%p239) target = $region48
    $region47: #{tpu_custom_call.1} parent=5 // pred_region
      %s243 = ssub.s32 %s13, 1
      %s244 = smul.u32 4, %s18
      %p245 = scmp.lt.s32.totalorder %s244, 7
      %s246 = scalar_select %p245, %s244, 7
      %s247 = smul.addr %s246, 8
      %s248 = scalar_lea.vmem %s0, %s247
      %p249 = pneg %p39
      %p250 = pneg %p36
      %p251 = pneg %p60
      %p252 = pneg %p57
      %p253 = pneg %p81
      %p254 = pneg %p78
      %p255 = pneg %p102
      %p256 = pneg %p99
      %p257 = pneg %p123
      %p258 = pneg %p120
      %p259 = pneg %p144
      %p260 = pneg %p141
      %p261 = pneg %p165
      %p262 = pneg %p162
      %p263 = pneg %p191
      %p264 = pneg %p188
      %s265 = smul.u32 4, %s18
      %p266 = scmp.lt.s32.totalorder %s265, 7
      %s267 = scalar_select %p266, %s265, 7
      %s268 = smul.addr %s267, 8
      %s269 = scalar_lea.vmem %s7, %s268
      %s270 = smul.u32 4, %s18
      %p271 = scmp.lt.s32.totalorder %s270, 7
      %s272 = scalar_select %p271, %s270, 7
      %s273 = smul.addr %s272, 8
      %s274 = scalar_lea.vmem %s0, %s273
      %s275 = smul.u32 4, %s18
      %s276 = smul.u32 4, %s18
      %p277 = scmp.lt.s32.totalorder %s276, 7
      %s278 = scalar_select %p277, %s276, 7
      %s279 = smul.addr %s278, 8
      %s280 = scalar_lea.vmem %s7, %s279
      %s281 = smul.u32 4, %s18
      %v283 = vld [vmem:[%s274] sm:$0xff]
      %v284 = vld [vmem:[%s274 + $0x8] sm:$0xff]
      %v285 = vld [vmem:[%s274 + $0x10] sm:$0xff]
      %v286 = vld [vmem:[%s274 + $0x18] sm:$0xff]
      %v287 = vpack.c.bf16 %v284, %v283
      %v288 = vpack.c.bf16 %v286, %v285
      %v289 = vld [vmem:[%s1] sm:$0xf]
      %v290 = vld [vmem:[%s1 + $0x4] sm:$0xf]
      %v291 = vld [vmem:[%s1 + $0x8] sm:$0xf]
      %v292 = vld [vmem:[%s1 + $0xc] sm:$0xf]
      %v293 = vld [vmem:[%s2] sm:$0x1]
      %v295 = vlaneseq
      %v296 = vshrl.u32 %v295, 7
      %v297 = vsub.s32 0, %v296
      %v298 = vrot.slane %v293, %v297
      %v304 = vunpack.c.l.b16 %v289
      %v305 = vunpack.c.l.b16 %v290
      %v306 = vunpack.c.l.b16 %v291
      %v307 = vunpack.c.l.b16 %v292
      %v308 = vpack.c.b16 %v305, %v304
      %v309 = vpack.c.b16 %v307, %v306
      %vm312 = vcmask 261120
      %v314 = vsel %vm312, %v287, 0
      %v317 = vsel %vm312, %v288, 0
      %319 = vmatprep.subr.bf16.mxu0 0
      %320 = vmatpush1.bf16.msra.mxu0 %v308
      %321 = vmatprep.subr.bf16.mxu0 0
      %322 = vmatpush1.bf16.msra.mxu0 %v309
      %323 = vmatprep.subr.bf16.mxu0 0
      %324 = vmatpush1.bf16.msra.mxu0 0
      %325 = vmatprep.subr.bf16.mxu0 0
      %326 = vmatpush1.bf16.msra.mxu0 0
      %327 = vmatprep.subr.bf16.mxu0 0
      %328 = vmatpush1.bf16.msra.mxu0 0
      %329 = vmatprep.subr.bf16.mxu0 0
      %330 = vmatpush1.bf16.msra.mxu0 0
      %331 = vmatprep.subr.bf16.mxu0 0
      %332 = vmatpush1.bf16.msra.mxu0 0
      %333 = vmatprep.subr.bf16.mxu0 0
      %334 = vmatpush1.bf16.msra.mxu0 0
      %335 = vmatprep.subr.bf16.mxu0 0
      %336 = vmatpush1.bf16.msra.mxu0 0
      %337 = vmatprep.subr.bf16.mxu0 0
      %338 = vmatpush1.bf16.msra.mxu0 0
      %339 = vmatprep.subr.bf16.mxu0 0
      %340 = vmatpush1.bf16.msra.mxu0 0
      %341 = vmatprep.subr.bf16.mxu0 0
      %342 = vmatpush1.bf16.msra.mxu0 0
      %343 = vmatprep.subr.bf16.mxu0 0
      %344 = vmatpush1.bf16.msra.mxu0 0
      %345 = vmatprep.subr.bf16.mxu0 0
      %346 = vmatpush1.bf16.msra.mxu0 0
      %347 = vmatprep.subr.bf16.mxu0 0
      %348 = vmatpush1.bf16.msra.mxu0 0
      %349 = vmatprep.subr.bf16.mxu0 0
      %350 = vmatpush1.bf16.msra.mxu0 0
      %351 = vmatprep.mubr.bf16.mxu0 0
      %352 = vmatmul.mubr.bf16.gmra.mrb[0].mxu0 %v314
      %v353 = vpop.f32.mrb[0].mxu0
      %v354 = vadd.f32 %v298, %v353
      %v355 = vpop.f32.mrb[0].mxu0
      %v356 = vpop.f32.mrb[0].mxu0
      %v357 = vadd.f32 %v298, %v356
      %v358 = vpop.f32.mrb[0].mxu0
      %359 = vmatprep.mubr.bf16.mxu0 0
      %360 = vmatmul.mubr.bf16.gmra.mrb[0].mxu0 %v317
      %v361 = vpop.f32.mrb[0].mxu0
      %v362 = vadd.f32 %v298, %v361
      %v363 = vpop.f32.mrb[0].mxu0
      %v364 = vpop.f32.mrb[0].mxu0
      %v365 = vadd.f32 %v298, %v364
      %v366 = vpop.f32.mrb[0].mxu0
      %367 = vdwg.mxu0
      %v368 = vmax.f32 %v354, 0.0
      %v369 = vmax.f32 %v357, 0.0
      %v370 = vmax.f32 %v362, 0.0
      %v371 = vmax.f32 %v365, 0.0
      %v372 = vpack.c.bf16 %v369, %v368
      %v373 = vpack.c.bf16 %v371, %v370
      %v374 = vld [vmem:[%s3] sm:$0xf]
      %v375 = vld [vmem:[%s3 + $0x4] sm:$0xf]
      %v376 = vld [vmem:[%s3 + $0x8] sm:$0xf]
      %v377 = vld [vmem:[%s3 + $0xc] sm:$0xf]
      %v378 = vld [vmem:[%s3 + $0x10] sm:$0xf]
      %v379 = vld [vmem:[%s3 + $0x14] sm:$0xf]
      %v380 = vld [vmem:[%s3 + $0x18] sm:$0xf]
      %v381 = vld [vmem:[%s3 + $0x1c] sm:$0xf]
      %v382 = vld [vmem:[%s4] sm:$0x1]
      %v384 = vlaneseq
      %v385 = vshrl.u32 %v384, 7
      %v386 = vsub.s32 0, %v385
      %v387 = vrot.slane %v382, %v386
      %v397 = vunpack.c.l.b16 %v374
      %v398 = vunpack.c.l.b16 %v375
      %v399 = vunpack.c.l.b16 %v376
      %v400 = vunpack.c.l.b16 %v377
      %v401 = vunpack.c.l.b16 %v378
      %v402 = vunpack.c.l.b16 %v379
      %v403 = vunpack.c.l.b16 %v380
      %v404 = vunpack.c.l.b16 %v381
      %v405 = vpack.c.b16 %v398, %v397
      %v406 = vpack.c.b16 %v400, %v399
      %v407 = vpack.c.b16 %v402, %v401
      %v408 = vpack.c.b16 %v404, %v403
      %vm413 = vcmask 523264
      %v415 = vsel %vm413, %v372, 0
      %v418 = vsel %vm413, %v373, 0
      %420 = vmatprep.subr.bf16.mxu0 0
      %421 = vmatpush1.bf16.msra.mxu0 %v405
      %422 = vmatprep.subr.bf16.mxu0 0
      %423 = vmatpush1.bf16.msra.mxu0 %v406
      %424 = vmatprep.subr.bf16.mxu0 0
      %425 = vmatpush1.bf16.msra.mxu0 %v407
      %426 = vmatprep.subr.bf16.mxu0 0
      %427 = vmatpush1.bf16.msra.mxu0 %v408
      %428 = vmatprep.subr.bf16.mxu0 0
      %429 = vmatpush1.bf16.msra.mxu0 0
      %430 = vmatprep.subr.bf16.mxu0 0
      %431 = vmatpush1.bf16.msra.mxu0 0
      %432 = vmatprep.subr.bf16.mxu0 0
      %433 = vmatpush1.bf16.msra.mxu0 0
      %434 = vmatprep.subr.bf16.mxu0 0
      %435 = vmatpush1.bf16.msra.mxu0 0
      %436 = vmatprep.subr.bf16.mxu0 0
      %437 = vmatpush1.bf16.msra.mxu0 0
      %438 = vmatprep.subr.bf16.mxu0 0
      %439 = vmatpush1.bf16.msra.mxu0 0
      %440 = vmatprep.subr.bf16.mxu0 0
      %441 = vmatpush1.bf16.msra.mxu0 0
      %442 = vmatprep.subr.bf16.mxu0 0
      %443 = vmatpush1.bf16.msra.mxu0 0
      %444 = vmatprep.subr.bf16.mxu0 0
      %445 = vmatpush1.bf16.msra.mxu0 0
      %446 = vmatprep.subr.bf16.mxu0 0
      %447 = vmatpush1.bf16.msra.mxu0 0
      %448 = vmatprep.subr.bf16.mxu0 0
      %449 = vmatpush1.bf16.msra.mxu0 0
      %450 = vmatprep.subr.bf16.mxu0 0
      %451 = vmatpush1.bf16.msra.mxu0 0
      %452 = vmatprep.mubr.bf16.mxu0 0
      %453 = vmatmul.mubr.bf16.gmra.mrb[0].mxu0 %v415
      %v454 = vpop.f32.mrb[0].mxu0
      %v455 = vadd.f32 %v387, %v454
      %v456 = vpop.f32.mrb[0].mxu0
      %v457 = vpop.f32.mrb[0].mxu0
      %v458 = vadd.f32 %v387, %v457
      %v459 = vpop.f32.mrb[0].mxu0
      %460 = vmatprep.mubr.bf16.mxu0 0
      %461 = vmatmul.mubr.bf16.gmra.mrb[0].mxu0 %v418
      %v462 = vpop.f32.mrb[0].mxu0
      %v463 = vadd.f32 %v387, %v462
      %v464 = vpop.f32.mrb[0].mxu0
      %v465 = vpop.f32.mrb[0].mxu0
      %v466 = vadd.f32 %v387, %v465
      %v467 = vpop.f32.mrb[0].mxu0
      %468 = vdwg.mxu0
      %v469 = vmax.f32 %v455, 0.0
      %v470 = vmax.f32 %v458, 0.0
      %v471 = vmax.f32 %v463, 0.0
      %v472 = vmax.f32 %v466, 0.0
      %v473 = vpack.c.bf16 %v470, %v469
      %v474 = vpack.c.bf16 %v472, %v471
      %v475 = vld [vmem:[%s5] sm:$0xf]
      %v476 = vld [vmem:[%s5 + $0x4] sm:$0xf]
      %v477 = vld [vmem:[%s5 + $0x8] sm:$0xf]
      %v478 = vld [vmem:[%s5 + $0xc] sm:$0xf]
      %v479 = vld [vmem:[%s5 + $0x10] sm:$0xf]
      %v480 = vld [vmem:[%s5 + $0x14] sm:$0xf]
      %v481 = vld [vmem:[%s5 + $0x18] sm:$0xf]
      %v482 = vld [vmem:[%s5 + $0x1c] sm:$0xf]
      %v483 = vld [vmem:[%s6] sm:$0x1]
      %v485 = vlaneseq
      %v486 = vshrl.u32 %v485, 7
      %v487 = vsub.s32 0, %v486
      %v488 = vrot.slane %v483, %v487
      %v498 = vunpack.c.l.b16 %v475
      %v499 = vunpack.c.l.b16 %v476
      %v500 = vunpack.c.l.b16 %v477
      %v501 = vunpack.c.l.b16 %v478
      %v502 = vunpack.c.l.b16 %v479
      %v503 = vunpack.c.l.b16 %v480
      %v504 = vunpack.c.l.b16 %v481
      %v505 = vunpack.c.l.b16 %v482
      %v506 = vpack.c.b16 %v499, %v498
      %v507 = vpack.c.b16 %v501, %v500
      %v508 = vpack.c.b16 %v503, %v502
      %v509 = vpack.c.b16 %v505, %v504
      %v515 = vsel %vm413, %v473, 0
      %v518 = vsel %vm413, %v474, 0
      %520 = vmatprep.subr.bf16.mxu0 0
      %521 = vmatpush1.bf16.msra.mxu0 %v506
      %522 = vmatprep.subr.bf16.mxu0 0
      %523 = vmatpush1.bf16.msra.mxu0 %v507
      %524 = vmatprep.subr.bf16.mxu0 0
      %525 = vmatpush1.bf16.msra.mxu0 %v508
      %526 = vmatprep.subr.bf16.mxu0 0
      %527 = vmatpush1.bf16.msra.mxu0 %v509
      %528 = vmatprep.subr.bf16.mxu0 0
      %529 = vmatpush1.bf16.msra.mxu0 0
      %530 = vmatprep.subr.bf16.mxu0 0
      %531 = vmatpush1.bf16.msra.mxu0 0
      %532 = vmatprep.subr.bf16.mxu0 0
      %533 = vmatpush1.bf16.msra.mxu0 0
      %534 = vmatprep.subr.bf16.mxu0 0
      %535 = vmatpush1.bf16.msra.mxu0 0
      %536 = vmatprep.subr.bf16.mxu0 0
      %537 = vmatpush1.bf16.msra.mxu0 0
      %538 = vmatprep.subr.bf16.mxu0 0
      %539 = vmatpush1.bf16.msra.mxu0 0
      %540 = vmatprep.subr.bf16.mxu0 0
      %541 = vmatpush1.bf16.msra.mxu0 0
      %542 = vmatprep.subr.bf16.mxu0 0
      %543 = vmatpush1.bf16.msra.mxu0 0
      %544 = vmatprep.subr.bf16.mxu0 0
      %545 = vmatpush1.bf16.msra.mxu0 0
      %546 = vmatprep.subr.bf16.mxu0 0
      %547 = vmatpush1.bf16.msra.mxu0 0
      %548 = vmatprep.subr.bf16.mxu0 0
      %549 = vmatpush1.bf16.msra.mxu0 0
      %550 = vmatprep.subr.bf16.mxu0 0
      %551 = vmatpush1.bf16.msra.mxu0 0
      %552 = vmatprep.mubr.bf16.mxu0 0
      %553 = vmatmul.mubr.bf16.gmra.mrb[0].mxu0 %v515
      %v554 = vpop.f32.mrb[0].mxu0
      %v555 = vadd.f32 %v488, %v554
      %v556 = vpop.f32.mrb[0].mxu0
      %v557 = vpop.f32.mrb[0].mxu0
      %v558 = vadd.f32 %v488, %v557
      %v559 = vpop.f32.mrb[0].mxu0
      %560 = vmatprep.mubr.bf16.mxu0 0
      %561 = vmatmul.mubr.bf16.gmra.mrb[0].mxu0 %v518
      %v562 = vpop.f32.mrb[0].mxu0
      %v563 = vadd.f32 %v488, %v562
      %v564 = vpop.f32.mrb[0].mxu0
      %v565 = vpop.f32.mrb[0].mxu0
      %v566 = vadd.f32 %v488, %v565
      %v567 = vpop.f32.mrb[0].mxu0
      %568 = vdwg.mxu0
      %vm569 = vcmask 31744
      %570 = vst.msk [vmem:[%s280] sm:$0xff] %vm569, %v555
      %571 = vst.msk [vmem:[%s280 + $0x8] sm:$0xff] %vm569, %v558
      %572 = vst.msk [vmem:[%s280 + $0x10] sm:$0xff] %vm569, %v563
      %573 = vst.msk [vmem:[%s280 + $0x18] sm:$0xff] %vm569, %v566
      %s574 = smul.u32 4, %s18
      %p575 = scmp.lt.s32.totalorder %s574, 7
      %s576 = scalar_select %p575, %s574, 7
      %s577 = smul.addr %s576, 8
      %s578 = scalar_lea.vmem %s7, %s577
      // Predicated region
      $region49: #{tpu_custom_call.1} parent=47 // pred_check
        %p579 = pneg %p188
      $region50: #{tpu_custom_call.1} parent=47 // pred_check_branch
        %581 = sbr.rel (%p579) target = $region52
      $region51: #{tpu_custom_call.1} parent=47 // pred_region
        %s582 = smul.u32 4, %s18
      $region52: #{tpu_custom_call.1} parent=47 // pred_fallthru
        _
    $region48: #{tpu_custom_call.1} parent=5 // pred_fallthru
      _
    %p583 = scmp.le.s32.totalorder 2, %s13
    // Predicated region
    $region53: #{tpu_custom_call.1} parent=5 // pred_check
      %p584 = pneg %p583
    $region54: #{tpu_custom_call.1} parent=5 // pred_check_branch
      %586 = sbr.rel (%p584) target = $region56
    $region55: #{tpu_custom_call.1} parent=5 // pred_region
      %s587 = ssub.s32 %s13, 2
      // Predicated region
      $region57: #{tpu_custom_call.1} parent=55 // pred_check
        %p588 = pneg %p194
      $region58: #{tpu_custom_call.1} parent=55 // pred_check_branch
        %590 = sbr.rel (%p588) target = $region60
      $region59: #{tpu_custom_call.1} parent=55 // pred_region
        %s591 = smul.u32 4, %s19
        %p592 = scmp.lt.s32.totalorder %s591, 7
        %s593 = scalar_select %p592, %s591, 7
        %s594 = smul.addr %s593, 8
        %s595 = scalar_lea.vmem %s7, %s594
      $region60: #{tpu_custom_call.1} parent=55 // pred_fallthru
        _
    $region56: #{tpu_custom_call.1} parent=5 // pred_fallthru
      _
  $region6: #{tpu_custom_call.1} parent=0 // loop_footer
    %s17 = sadd.s32 1, %s13
  $region7: #{tpu_custom_call.1} parent=0 // loop_footer_branch
    %12 = sbr.rel target = $region3
  $region8: #{tpu_custom_call.1} parent=0 // loop_exit
    _

</llo_original>
